<compile_context>
chip_gen: v5e
topology: v5e:2x2
jax: 0.10.0
libtpu: 0.0.40
codegen_flags: <defaults>
</compile_context>

<pallas_src>
import functools

import jax
import jax.numpy as jnp
from jax.experimental import pallas as pl
from jax.experimental.pallas import tpu as pltpu


# ----------------------------------------------------------------------------
# Pallas kernel
# ----------------------------------------------------------------------------
def _tv_partial_kernel(x_ref, o_ref, *, inv_count_h, inv_count_w):
    """Per-tile partial of  sum(dh^2)/count_h + sum(dw^2)/count_w.

    x_ref: (bc_tile, H, W) in the input's native dtype.
    o_ref: (1, H, W) f32 partial, reduced only over the leading bc_tile axis
           (vreg-wise VALU adds; no in-kernel cross-lane/sublane reduce).
    """
    x = x_ref[...].astype(jnp.float32)                     # upcast in-kernel

    # Shift-by-one neighbours via XLU rotates instead of offset slices.
    x_up = pltpu.roll(x, shift=1, axis=1)                  # row i <- row i-1 (wraps)
    x_lf = pltpu.roll(x, shift=1, axis=2)                  # col j <- col j-1 (wraps)

    row = jax.lax.broadcasted_iota(jnp.int32, x.shape, 1)
    col = jax.lax.broadcasted_iota(jnp.int32, x.shape, 2)

    # Mask out the wrapped first row / first column (whatever the rotate put
    # there), leaving exactly the (H-1)*W and H*(W-1) valid differences.
    dh = jnp.where(row >= 1, x - x_up, 0.0)
    dw = jnp.where(col >= 1, x - x_lf, 0.0)

    contrib = dh * dh * inv_count_h + dw * dw * inv_count_w
    o_ref[...] = jnp.sum(contrib, axis=0, keepdims=True)   # (1, H, W)


# ----------------------------------------------------------------------------
# Tile picker (padded-VMEM-aware)
# ----------------------------------------------------------------------------
def _round_up(a, b):
    return ((a + b - 1) // b) * b


def _pick_bc_tile(bc, h, w, in_itemsize, budget_bytes):
    """Largest divisor of `bc` whose double-buffered input block plus f32
    in-kernel temporaries fit under `budget_bytes` (padded VMEM layout)."""
    # Sub-32-bit dtypes pack along sublanes: 8 sublanes for f32, 16 for bf16, ...
    sublane_pack = 8 * max(1, 4 // max(1, in_itemsize))
    plane_in = _round_up(h, sublane_pack) * _round_up(w, 128) * in_itemsize
    plane_f32 = _round_up(h, 8) * _round_up(w, 128) * 4
    # 2x input (double-buffering) + ~4 f32-sized live temporaries per plane.
    per_bc = 2 * plane_in + 4 * plane_f32

    best = 1
    for d in range(1, bc + 1):
        if bc % d == 0 and d * per_bc <= budget_bytes:
            best = d

    # Keep at least 2 grid steps when possible so the "parallel" axis can be
    # split across both TensorCores on v7x.
    if bc > 1:
        best = min(best, max(bc // 2, 1))
        while bc % best != 0:
            best -= 1
    return best


# ----------------------------------------------------------------------------
# Wrapper
# ----------------------------------------------------------------------------
def tv_loss_pallas(x, tv_weight=1.0):
    """Total-variation loss; x is NCHW, returns a scalar (matches the module)."""
    B, C, H, W = x.shape
    if H < 2 or W < 2:
        # The PyTorch reference divides by zero here; guard explicitly.
        raise ValueError("TVLoss requires H >= 2 and W >= 2")

    BC = B * C
    xr = x.reshape(BC, H, W)                    # diffs never cross this axis

    # TODO(synk): if a single padded (H, W) plane exceeds the VMEM budget even
    # at bc_tile=1, tile H with a one-row halo; unnecessary at these sizes.
    #
    # Conservative, generation-safe budget: ~32 MiB of accounted footprint with
    # the scoped limit raised to 48 MiB (fits v7x's 64 MiB physical VMEM and is
    # comfortably inside v5e/v6e's 128 MiB).
    bc_tile = _pick_bc_tile(BC, H, W, x.dtype.itemsize, budget_bytes=32 << 20)
    g = BC // bc_tile

    inv_count_h = 1.0 / float(C * (H - 1) * W)
    inv_count_w = 1.0 / float(C * H * (W - 1))
    kernel = functools.partial(
        _tv_partial_kernel, inv_count_h=inv_count_h, inv_count_w=inv_count_w)

    partials = pl.pallas_call(
        kernel,
        out_shape=jax.ShapeDtypeStruct((g, H, W), jnp.float32),
        grid=(g,),
        in_specs=[pl.BlockSpec((bc_tile, H, W), lambda i: (i, 0, 0))],
        out_specs=pl.BlockSpec((1, H, W), lambda i: (i, 0, 0)),
        compiler_params=pltpu.CompilerParams(
            dimension_semantics=("parallel",),
            vmem_limit_bytes=48 << 20),
    )(xr)

    # Tiny (g*H*W-element) final reduce + static scaling in the wrapper.
    total = jnp.sum(partials)
    return (tv_weight * 2.0 / B) * total


# ----------------------------------------------------------------------------
def _tv_loss_ref(x, tv_weight=1.0):
    """Pure-JAX reference mirroring the PyTorch module exactly."""
    B, C, H, W = x.shape
    count_h = C * (H - 1) * W
    count_w = C * H * (W - 1)
    h_tv = jnp.sum((x[:, :, 1:, :] - x[:, :, :-1, :]) ** 2)
    w_tv = jnp.sum((x[:, :, :, 1:] - x[:, :, :, :-1]) ** 2)
    return tv_weight * 2.0 * (h_tv / count_h + w_tv / count_w) / B


if __name__ == "__main__":
    key = jax.random.PRNGKey(0)
    x = jax.random.normal(key, (2, 4, 16, 16), jnp.float32)   # NCHW

    loss = jax.jit(tv_loss_pallas)(x)
    loss = jax.block_until_ready(loss)

    ref = _tv_loss_ref(x)
    assert loss.shape == (), loss.shape
    assert bool(jnp.isfinite(loss))
    assert bool(jnp.allclose(loss, ref, rtol=1e-5, atol=1e-6)), (loss, ref)
    print("KERNEL_OK")
</pallas_src>

<mosaic_0001>
module attributes {stable_mosaic.version = 11 : i64} {
  func.func @_tv_partial_kernel(%arg0: i32, %arg1: memref<4x16x16xf32, #tpu.memory_space<vmem>>, %arg2: memref<1x16x16xf32, #tpu.memory_space<vmem>>) attributes {dimension_semantics = [#tpu.dimension_semantics<parallel>], iteration_bounds = array<i64: 2>, scalar_prefetch = 0 : i64, scratch_operands = 0 : i64, tpu.core_type = #tpu.core_type<tc>, window_params = [{transform_indices = @transform_0, window_bounds = array<i64: 4, 16, 16>}, {transform_indices = @transform_1, window_bounds = array<i64: 1, 16, 16>}]} {
    %c0 = arith.constant 0 : index
    %c0_0 = arith.constant 0 : index
    %c0_1 = arith.constant 0 : index
    %0 = vector.load %arg1[%c0, %c0_0, %c0_1] : memref<4x16x16xf32, #tpu.memory_space<vmem>>, vector<4x16x16xf32>
    %c1_i32 = arith.constant 1 : i32
    %1 = tpu.dynamic_rotate %0 by %c1_i32 dim 1 : vector<4x16x16xf32>, i32 -> vector<4x16x16xf32>
    %c1_i32_2 = arith.constant 1 : i32
    %2 = tpu.dynamic_rotate %0 by %c1_i32_2 dim 2 : vector<4x16x16xf32>, i32 -> vector<4x16x16xf32>
    %3 = tpu.iota {dimensions = array<i32: 1>} : vector<4x16x16xi32>
    %4 = tpu.iota {dimensions = array<i32: 2>} : vector<4x16x16xi32>
    %c1_i32_3 = arith.constant 1 : i32
    %5 = vector.broadcast %c1_i32_3 : i32 to vector<4x16x16xi32>
    %6 = arith.cmpi sge, %3, %5 : vector<4x16x16xi32>
    %7 = arith.subf %0, %1 : vector<4x16x16xf32>
    %cst = arith.constant 0.000000e+00 : f32
    %8 = vector.broadcast %cst : f32 to vector<4x16x16xf32>
    %9 = arith.select %6, %7, %8 : vector<4x16x16xi1>, vector<4x16x16xf32>
    %c1_i32_4 = arith.constant 1 : i32
    %10 = vector.broadcast %c1_i32_4 : i32 to vector<4x16x16xi32>
    %11 = arith.cmpi sge, %4, %10 : vector<4x16x16xi32>
    %12 = arith.subf %0, %2 : vector<4x16x16xf32>
    %cst_5 = arith.constant 0.000000e+00 : f32
    %13 = vector.broadcast %cst_5 : f32 to vector<4x16x16xf32>
    %14 = arith.select %11, %12, %13 : vector<4x16x16xi1>, vector<4x16x16xf32>
    %15 = arith.mulf %9, %9 : vector<4x16x16xf32>
    %cst_6 = arith.constant 0.00104166672 : f32
    %16 = vector.broadcast %cst_6 : f32 to vector<4x16x16xf32>
    %17 = arith.mulf %15, %16 : vector<4x16x16xf32>
    %18 = arith.mulf %14, %14 : vector<4x16x16xf32>
    %cst_7 = arith.constant 0.00104166672 : f32
    %19 = vector.broadcast %cst_7 : f32 to vector<4x16x16xf32>
    %20 = arith.mulf %18, %19 : vector<4x16x16xf32>
    %21 = arith.addf %17, %20 : vector<4x16x16xf32>
    %cst_8 = arith.constant dense<0.000000e+00> : vector<16x16xf32>
    %22 = vector.multi_reduction <add>, %21, %cst_8 [0] : vector<4x16x16xf32> to vector<16x16xf32>
    %23 = vector.shape_cast %22 : vector<16x16xf32> to vector<1x16x16xf32>
    %c0_9 = arith.constant 0 : index
    %c0_10 = arith.constant 0 : index
    %c0_11 = arith.constant 0 : index
    %24 = vector.load %arg2[%c0_9, %c0_10, %c0_11] : memref<1x16x16xf32, #tpu.memory_space<vmem>>, vector<1x16x16xf32>
    tpu.vector_store %arg2[%c0_9, %c0_10, %c0_11], %23 {strides = array<i32>} : memref<1x16x16xf32, #tpu.memory_space<vmem>>, vector<1x16x16xf32>,
    return
  }
  func.func @transform_0(%arg0: i32) -> (i32, i32, i32) {
    %c0_i32 = arith.constant 0 : i32
    %c0_i32_0 = arith.constant 0 : i32
    %c0_i32_1 = arith.constant 0 : i32
    return %arg0, %c0_i32, %c0_i32_0 : i32, i32, i32
  }
  func.func @transform_1(%arg0: i32) -> (i32, i32, i32) {
    %c0_i32 = arith.constant 0 : i32
    %c0_i32_0 = arith.constant 0 : i32
    %c0_i32_1 = arith.constant 0 : i32
    return %arg0, %c0_i32, %c0_i32_0 : i32, i32, i32
  }
}

</mosaic_0001>

<llo_original>
// kernel: tv_loss_pallas.1
$region0: #{tv_loss_pallas.1}
  #allocation0 [shape = 'u32[]', space=smem, size = 0x4, offset = 0x4, fixed_abs, tag = 'smem constant byte address 0x4 - core index']
  #allocation1 [shape = 'u32[72,128]{1,0:T(1,128)}', space=vmem, size = 0x9000, scoped, tag = 'internal scratch']
  %s0 = inlined_call_operand.hbm [shape: f32[8,16,16], index: 0, kind: input, shape index: {}]
  %s1 = inlined_call_operand.vmem [shape: f32[2,16,16], index: 1, kind: output, shape index: {}]
  %s2 = sld [smem:[#allocation0]]
  $region41: #{tv_loss_pallas.1} parent=0
    _
  %s4 = ssub.s32 1, %s2
  %s5 = scalar_select 0, %s4, %s2
  $region1: #{tv_loss_pallas.1} parent=0
    #allocation2 [shape = 'u8[65536]{0}', space=vmem, size = 0x10000, scoped, tag = 'input window, operand 0']
    #allocation3 [shape = 's32[2]{0}', space=sflag, size = 0x8, scoped, tag = 'scoped memory for tv_loss_pallas.1']
    %6 = vsyncpa [#allocation3], 0
    %s7 = scalar_lea.sflag [#allocation3], 1
    %8 = vsyncpa %s7, 0
    loop: start=0, step=1, limit=4
    $region2: #{tv_loss_pallas.1} parent=1 // loop_pre_header
      _
    $region3: #{tv_loss_pallas.1} parent=1 // loop_header
      %s10 = sphi 0, %s14
      %p11 = scmp.ge.s32.totalorder %s10, 4
      %s20 = sphi 0, %s22
      %s23 = sphi 0, %s20
      %s24 = sphi 0, %s23
      %s40 = sphi 0, %s24
      %s46 = sphi 0, %s48
      %s49 = sphi 0, %s46
      %s50 = sphi 0, %s49
      %s66 = sphi 0, %s50
    $region4: #{tv_loss_pallas.1} parent=1 // loop_header_branch
      %13 = sbr.rel (%p11) target = $region8
    $region5: #{tv_loss_pallas.1} parent=1 // loop_body
      %s15 = ssub.s32 %s10, 1
      %s16 = ssub.s32 %s10, 2
      %s17 = sadd.s32 %s10, 1
      %s18 = ssub.s32 %s10, %s17
      %p19 = scmp.eq.s32.totalorder %s18, 0
      %s21 = sadd.s32 %s20, 1
      %s22 = scalar_select %p19, %s20, %s21
      %p25 = pneg %p19
      %p26 = scmp.eq.s32.totalorder %s10, 1
      %p27 = por %p25, %p26
      %p28 = scmp.ne.s32.totalorder %s20, %s23
      %p29 = scmp.eq.s32.totalorder %s10, 0
      %p30 = por %p28, %p29
      %p31 = scmp.ne.s32.totalorder %s20, %s23
      %p32 = scmp.eq.s32.totalorder %s15, 1
      %p33 = por %p31, %p32
      %p34 = scmp.ne.s32.totalorder %s23, %s24
      %p35 = scmp.eq.s32.totalorder %s15, 0
      %p36 = por %p34, %p35
      %p37 = scmp.ne.s32.totalorder %s23, %s24
      %p38 = scmp.eq.s32.totalorder %s16, 1
      %p39 = por %p37, %p38
      %p41 = scmp.ne.s32.totalorder %s24, %s40
      %p42 = scmp.eq.s32.totalorder %s16, 0
      %p43 = por %p41, %p42
      %s44 = ssub.s32 %s10, %s17
      %p45 = scmp.eq.s32.totalorder %s44, 0
      %s47 = sadd.s32 %s46, 1
      %s48 = scalar_select %p45, %s46, %s47
      %p51 = pneg %p45
      %p52 = scmp.eq.s32.totalorder %s10, 1
      %p53 = por %p51, %p52
      %p54 = scmp.ne.s32.totalorder %s46, %s49
      %p55 = scmp.eq.s32.totalorder %s10, 0
      %p56 = por %p54, %p55
      %p57 = scmp.ne.s32.totalorder %s46, %s49
      %p58 = scmp.eq.s32.totalorder %s15, 1
      %p59 = por %p57, %p58
      %p60 = scmp.ne.s32.totalorder %s49, %s50
      %p61 = scmp.eq.s32.totalorder %s15, 0
      %p62 = por %p60, %p61
      %p63 = scmp.ne.s32.totalorder %s49, %s50
      %p64 = scmp.eq.s32.totalorder %s16, 1
      %p65 = por %p63, %p64
      %p67 = scmp.ne.s32.totalorder %s50, %s66
      %p68 = scmp.eq.s32.totalorder %s16, 0
      %p69 = por %p67, %p68
      %p70 = scmp.le.s32.totalorder 1, %s10
      %p71 = scmp.lt.s32.totalorder %s10, 3
      %p72 = pnand %p70, %p71
      %p73 = pneg %p72
      // Predicated region
      $region9: #{tv_loss_pallas.1} parent=5 // pred_check
        _
      $region10: #{tv_loss_pallas.1} parent=5 // pred_check_branch
        %75 = sbr.rel (%p72) target = $region12
      $region11: #{tv_loss_pallas.1} parent=5 // pred_region
        %s76 = ssub.s32 %s10, 1
      $region12: #{tv_loss_pallas.1} parent=5 // pred_fallthru
        _
      %p77 = scmp.lt.s32.totalorder %s10, 2
      // Predicated region
      $region13: #{tv_loss_pallas.1} parent=5 // pred_check
        %p78 = pneg %p77
      $region14: #{tv_loss_pallas.1} parent=5 // pred_check_branch
        %80 = sbr.rel (%p78) target = $region16
      $region15: #{tv_loss_pallas.1} parent=5 // pred_region
        // Predicated region
        $region17: #{tv_loss_pallas.1} parent=15 // pred_check
          %p81 = pneg %p30
        $region18: #{tv_loss_pallas.1} parent=15 // pred_check_branch
          %83 = sbr.rel (%p81) target = $region20
        $region19: #{tv_loss_pallas.1} parent=15 // pred_region
          %s84 = sand.u32 %s20, 1
          %s85 = scalar_lea.sflag [#allocation3], %s84
          %s86 = sand.u32 %s20, 1
          %s87 = smul.addr %s86, 64
          %s88 = scalar_lea.vmem [#allocation2], %s87
          %s89 = smul.u32 4, %s10
          %91 = vsyncadd %s85, 0
          %s92 = smul.addr %s89, 2
          %s93 = smul.addr %s92, 8
          %s94 = scalar_lea.hbm %s0, %s93
          %s95 = sshll.u32 %s94, 4
          %s96 = int_to_ptr.hbm [resolvable:$true] %s95
          %s97 = sshll.u32 %s88, 4
          %s98 = int_to_ptr.vmem [resolvable:$true] %s97
          %103 = dma.hbm_to_vmem [thread:$0]  %s96, 1024, %s98, %s85, 128, 128, 8
        $region20: #{tv_loss_pallas.1} parent=15 // pred_fallthru
          _
      $region16: #{tv_loss_pallas.1} parent=5 // pred_fallthru
        _
      %p104 = scmp.le.s32.totalorder 1, %s10
      %p105 = scmp.lt.s32.totalorder %s10, 3
      %p106 = pnand %p104, %p105
      %p107 = pneg %p106
      // Predicated region
      $region21: #{tv_loss_pallas.1} parent=5 // pred_check
        _
      $region22: #{tv_loss_pallas.1} parent=5 // pred_check_branch
        %109 = sbr.rel (%p106) target = $region24
      $region23: #{tv_loss_pallas.1} parent=5 // pred_region
        %s110 = ssub.s32 %s10, 1
        %s111 = sand.u32 %s23, 1
        %s112 = scalar_lea.sflag [#allocation3], %s111
        %s113 = sand.u32 %s23, 1
        %s114 = smul.addr %s113, 64
        %s115 = scalar_lea.vmem [#allocation2], %s114
        // Predicated region
        $region25: #{tv_loss_pallas.1} parent=23 // pred_check
          %p116 = pneg %p36
        $region26: #{tv_loss_pallas.1} parent=23 // pred_check_branch
          %118 = sbr.rel (%p116) target = $region28
        $region27: #{tv_loss_pallas.1} parent=23 // pred_region
          %120 = dma.done %s112, 1024
        $region28: #{tv_loss_pallas.1} parent=23 // pred_fallthru
          _
        %s121 = sand.u32 %s23, 1
        %s122 = scalar_lea.sflag [#allocation3], %s121
        %s123 = sand.u32 %s23, 1
        %s124 = smul.addr %s123, 64
        %s125 = scalar_lea.vmem [#allocation2], %s124
        %p126 = pneg %p36
        %p127 = pneg %p33
        %p128 = pneg %p62
        %p129 = pneg %p59
        %p130 = scmp.lt.s32.totalorder %s15, 1
        %s131 = scalar_select %p130, %s15, 1
        %s132 = smul.addr %s131, 2
        %s133 = smul.addr %s132, 8
        %s134 = scalar_lea.vmem %s1, %s133
        %s135 = smul.u32 4, %s15
        %p136 = scmp.lt.s32.totalorder %s15, 1
        %s137 = scalar_select %p136, %s15, 1
        %s138 = smul.addr %s137, 2
        %s139 = smul.addr %s138, 8
        %s140 = scalar_lea.vmem %s1, %s139
        %v141 = vld [vmem:[%s115] sm:$0xff]
        %v142 = vld [vmem:[%s115 + $0x8] sm:$0xff]
        %v143 = vld [vmem:[%s115 + $0x10] sm:$0xff]
        %v144 = vld [vmem:[%s115 + $0x18] sm:$0xff]
        %v145 = vld [vmem:[%s115 + $0x20] sm:$0xff]
        %v146 = vld [vmem:[%s115 + $0x28] sm:$0xff]
        %v147 = vld [vmem:[%s115 + $0x30] sm:$0xff]
        %v148 = vld [vmem:[%s115 + $0x38] sm:$0xff]
        %v149 = vrot.slane %v141, 7
        %v150 = vrot.slane %v143, 7
        %v151 = vrot.slane %v145, 7
        %v152 = vrot.slane %v147, 7
        %v153 = vrot.slane %v142, 7
        %v154 = vrot.slane %v144, 7
        %v155 = vrot.slane %v146, 7
        %v156 = vrot.slane %v148, 7
        %v157 = vlaneseq
        %v158 = vshrl.u32 %v157, 7
        %vm159 = vcmp.lt.s32.totalorder %v158, 1
        %v160 = vsel %vm159, %v149, %v153
        %v161 = vsel %vm159, %v150, %v154
        %v162 = vsel %vm159, %v151, %v155
        %v163 = vsel %vm159, %v152, %v156
        %v164 = vsel %vm159, %v153, %v149
        %v165 = vsel %vm159, %v154, %v150
        %v166 = vsel %vm159, %v155, %v151
        %v167 = vsel %vm159, %v156, %v152
        %vm168 = vcmask 1047680
        %169 = vrot.lane.b32.xlu0 %v141, 16
        %v170 = vpop.permute.xlu0 %169
        %v171 = vsel %vm168, %v170, %v141
        %172 = vrot.lane.b32.xlu0 %v142, 16
        %v173 = vpop.permute.xlu0 %172
        %v174 = vsel %vm168, %v173, %v142
        %175 = vrot.lane.b32.xlu0 %v143, 16
        %v176 = vpop.permute.xlu0 %175
        %v177 = vsel %vm168, %v176, %v143
        %178 = vrot.lane.b32.xlu0 %v144, 16
        %v179 = vpop.permute.xlu0 %178
        %v180 = vsel %vm168, %v179, %v144
        %181 = vrot.lane.b32.xlu0 %v145, 16
        %v182 = vpop.permute.xlu0 %181
        %v183 = vsel %vm168, %v182, %v145
        %184 = vrot.lane.b32.xlu0 %v146, 16
        %v185 = vpop.permute.xlu0 %184
        %v186 = vsel %vm168, %v185, %v146
        %187 = vrot.lane.b32.xlu0 %v147, 16
        %v188 = vpop.permute.xlu0 %187
        %v189 = vsel %vm168, %v188, %v147
        %190 = vrot.lane.b32.xlu0 %v148, 16
        %v191 = vpop.permute.xlu0 %190
        %v192 = vsel %vm168, %v191, %v148
        %193 = vrot.lane.b32.xlu0 %v171, 16
        %v194 = vpop.permute.xlu0 %193
        %195 = vrot.lane.b32.xlu0 %v174, 16
        %v196 = vpop.permute.xlu0 %195
        %197 = vrot.lane.b32.xlu0 %v177, 16
        %v198 = vpop.permute.xlu0 %197
        %199 = vrot.lane.b32.xlu0 %v180, 16
        %v200 = vpop.permute.xlu0 %199
        %201 = vrot.lane.b32.xlu0 %v183, 16
        %v202 = vpop.permute.xlu0 %201
        %203 = vrot.lane.b32.xlu0 %v186, 16
        %v204 = vpop.permute.xlu0 %203
        %205 = vrot.lane.b32.xlu0 %v189, 16
        %v206 = vpop.permute.xlu0 %205
        %207 = vrot.lane.b32.xlu0 %v192, 16
        %v208 = vpop.permute.xlu0 %207
        %v209 = vsel %vm168, %v194, %v141
        %v210 = vsel %vm168, %v196, %v142
        %v211 = vsel %vm168, %v198, %v143
        %v212 = vsel %vm168, %v200, %v144
        %v213 = vsel %vm168, %v202, %v145
        %v214 = vsel %vm168, %v204, %v146
        %v215 = vsel %vm168, %v206, %v147
        %v216 = vsel %vm168, %v208, %v148
        %v217 = vadd.s32 %v158, 8
        %v218 = vlaneseq
        %v219 = vand.u32 %v218, 127
        %vm220 = vcmp.ge.s32.totalorder %v158, 1
        %vm221 = vcmp.ge.s32.totalorder %v217, 1
        %v222 = vsub.f32 %v141, %v164
        %v223 = vsub.f32 %v142, %v160
        %v224 = vsub.f32 %v143, %v165
        %v225 = vsub.f32 %v144, %v161
        %v226 = vsub.f32 %v145, %v166
        %v227 = vsub.f32 %v146, %v162
        %v228 = vsub.f32 %v147, %v167
        %v229 = vsub.f32 %v148, %v163
        %v230 = vsel %vm220, %v222, 0.0
        %v231 = vsel %vm221, %v223, 0.0
        %v232 = vsel %vm220, %v224, 0.0
        %v233 = vsel %vm221, %v225, 0.0
        %v234 = vsel %vm220, %v226, 0.0
        %v235 = vsel %vm221, %v227, 0.0
        %v236 = vsel %vm220, %v228, 0.0
        %v237 = vsel %vm221, %v229, 0.0
        %vm238 = vcmp.ge.s32.totalorder %v219, 1
        %247 = vrot.lane.b32.xlu0 %v209, 113
        %v248 = vpop.permute.xlu0 %247
        %249 = vrot.lane.b32.xlu0 %v210, 113
        %v250 = vpop.permute.xlu0 %249
        %251 = vrot.lane.b32.xlu0 %v211, 113
        %v252 = vpop.permute.xlu0 %251
        %253 = vrot.lane.b32.xlu0 %v212, 113
        %v254 = vpop.permute.xlu0 %253
        %255 = vrot.lane.b32.xlu0 %v213, 113
        %v256 = vpop.permute.xlu0 %255
        %257 = vrot.lane.b32.xlu0 %v214, 113
        %v258 = vpop.permute.xlu0 %257
        %259 = vrot.lane.b32.xlu0 %v215, 113
        %v260 = vpop.permute.xlu0 %259
        %261 = vrot.lane.b32.xlu0 %v216, 113
        %v262 = vpop.permute.xlu0 %261
        %v271 = vsub.f32 %v141, %v248
        %v272 = vsub.f32 %v142, %v250
        %v273 = vsub.f32 %v143, %v252
        %v274 = vsub.f32 %v144, %v254
        %v275 = vsub.f32 %v145, %v256
        %v276 = vsub.f32 %v146, %v258
        %v277 = vsub.f32 %v147, %v260
        %v278 = vsub.f32 %v148, %v262
        %v279 = vsel %vm238, %v271, 0.0
        %v280 = vsel %vm238, %v272, 0.0
        %v281 = vsel %vm238, %v273, 0.0
        %v282 = vsel %vm238, %v274, 0.0
        %v283 = vsel %vm238, %v275, 0.0
        %v284 = vsel %vm238, %v276, 0.0
        %v285 = vsel %vm238, %v277, 0.0
        %v286 = vsel %vm238, %v278, 0.0
        %v287 = vmul.f32 %v230, %v230
        %v288 = vmul.f32 %v231, %v231
        %v289 = vmul.f32 %v232, %v232
        %v290 = vmul.f32 %v233, %v233
        %v291 = vmul.f32 %v234, %v234
        %v292 = vmul.f32 %v235, %v235
        %v293 = vmul.f32 %v236, %v236
        %v294 = vmul.f32 %v237, %v237
        %v295 = vmul.f32 %v287, 0.0010416667
        %v296 = vmul.f32 %v288, 0.0010416667
        %v297 = vmul.f32 %v289, 0.0010416667
        %v298 = vmul.f32 %v290, 0.0010416667
        %v299 = vmul.f32 %v291, 0.0010416667
        %v300 = vmul.f32 %v292, 0.0010416667
        %v301 = vmul.f32 %v293, 0.0010416667
        %v302 = vmul.f32 %v294, 0.0010416667
        %v303 = vmul.f32 %v279, %v279
        %v304 = vmul.f32 %v280, %v280
        %v305 = vmul.f32 %v281, %v281
        %v306 = vmul.f32 %v282, %v282
        %v307 = vmul.f32 %v283, %v283
        %v308 = vmul.f32 %v284, %v284
        %v309 = vmul.f32 %v285, %v285
        %v310 = vmul.f32 %v286, %v286
        %v311 = vmul.f32 %v303, 0.0010416667
        %v312 = vmul.f32 %v304, 0.0010416667
        %v313 = vmul.f32 %v305, 0.0010416667
        %v314 = vmul.f32 %v306, 0.0010416667
        %v315 = vmul.f32 %v307, 0.0010416667
        %v316 = vmul.f32 %v308, 0.0010416667
        %v317 = vmul.f32 %v309, 0.0010416667
        %v318 = vmul.f32 %v310, 0.0010416667
        %v319 = vadd.f32 %v295, %v311
        %v320 = vadd.f32 %v296, %v312
        %v321 = vadd.f32 %v297, %v313
        %v322 = vadd.f32 %v298, %v314
        %v323 = vadd.f32 %v299, %v315
        %v324 = vadd.f32 %v300, %v316
        %v325 = vadd.f32 %v301, %v317
        %v326 = vadd.f32 %v302, %v318
        %vm327 = vcmask 130048
        %v328 = vsel %vm327, %v319, 0.0
        %v329 = vsel %vm327, %v321, 0.0
        %v330 = vadd.f32 %v328, %v329
        %v331 = vsel %vm327, %v323, 0.0
        %v332 = vadd.f32 %v330, %v331
        %v333 = vsel %vm327, %v325, 0.0
        %v334 = vadd.f32 %v332, %v333
        %v335 = vsel %vm327, %v320, 0.0
        %v336 = vsel %vm327, %v322, 0.0
        %v337 = vadd.f32 %v335, %v336
        %v338 = vsel %vm327, %v324, 0.0
        %v339 = vadd.f32 %v337, %v338
        %v340 = vsel %vm327, %v326, 0.0
        %v341 = vadd.f32 %v339, %v340
        %342 = vst.msk [vmem:[%s140] sm:$0xff] %vm327, %v334
        %343 = vst.msk [vmem:[%s140 + $0x8] sm:$0xff] %vm327, %v341
        %p344 = scmp.lt.s32.totalorder %s15, 1
        %s345 = scalar_select %p344, %s15, 1
        %s346 = smul.addr %s345, 2
        %s347 = smul.addr %s346, 8
        %s348 = scalar_lea.vmem %s1, %s347
        // Predicated region
        $region29: #{tv_loss_pallas.1} parent=23 // pred_check
          %p349 = pneg %p59
        $region30: #{tv_loss_pallas.1} parent=23 // pred_check_branch
          %351 = sbr.rel (%p349) target = $region32
        $region31: #{tv_loss_pallas.1} parent=23 // pred_region
          _
        $region32: #{tv_loss_pallas.1} parent=23 // pred_fallthru
          _
      $region24: #{tv_loss_pallas.1} parent=5 // pred_fallthru
        _
      %p352 = scmp.le.s32.totalorder 2, %s10
      // Predicated region
      $region33: #{tv_loss_pallas.1} parent=5 // pred_check
        %p353 = pneg %p352
      $region34: #{tv_loss_pallas.1} parent=5 // pred_check_branch
        %355 = sbr.rel (%p353) target = $region36
      $region35: #{tv_loss_pallas.1} parent=5 // pred_region
        %s356 = ssub.s32 %s10, 2
        // Predicated region
        $region37: #{tv_loss_pallas.1} parent=35 // pred_check
          %p357 = pneg %p65
        $region38: #{tv_loss_pallas.1} parent=35 // pred_check_branch
          %359 = sbr.rel (%p357) target = $region40
        $region39: #{tv_loss_pallas.1} parent=35 // pred_region
          %p360 = scmp.lt.s32.totalorder %s16, 1
          %s361 = scalar_select %p360, %s16, 1
          %s362 = smul.addr %s361, 2
          %s363 = smul.addr %s362, 8
          %s364 = scalar_lea.vmem %s1, %s363
        $region40: #{tv_loss_pallas.1} parent=35 // pred_fallthru
          _
      $region36: #{tv_loss_pallas.1} parent=5 // pred_fallthru
        _
    $region6: #{tv_loss_pallas.1} parent=1 // loop_footer
      %s14 = sadd.s32 1, %s10
    $region7: #{tv_loss_pallas.1} parent=1 // loop_footer_branch
      %9 = sbr.rel target = $region3
    $region8: #{tv_loss_pallas.1} parent=1 // loop_exit
      _
    %365 = vsyncpa [#allocation3], 1
    %s366 = scalar_lea.sflag [#allocation3], 1
    %367 = vsyncpa %s366, 1

</llo_original>
